<compile_context>
chip_gen: v5e
topology: v5e:2x2
jax: 0.10.0
libtpu: 0.0.40
codegen_flags: <defaults>
</compile_context>

<pallas_src>
import functools

import jax
import jax.numpy as jnp
from jax import lax
from jax.experimental import pallas as pl
from jax.experimental.pallas import tpu as pltpu


def _smooth_ce_kernel(x_ref, tgt_ref, row_loss_ref, *, smoothing, num_classes):
    # x_ref: (TB, C) logits, tgt_ref: (TB, 1) int32 labels, row_loss_ref: (TB, 1) f32
    x = x_ref[...].astype(jnp.float32)                    # (TB, C)
    tgt = tgt_ref[...]                                    # (TB, 1)

    # Numerically stable log-softmax along the class (lane) axis.
    m = jnp.max(x, axis=-1, keepdims=True)                # (TB, 1)
    z = x - m
    lse = jnp.log(jnp.sum(jnp.exp(z), axis=-1, keepdims=True))
    log_prob = z - lse                                    # (TB, C)

    # Label-smoothed weights: (1 - s) at the target class, s/(C-1) elsewhere
    # (exactly what weight.scatter_(-1, target, 1 - s) produces).
    col = lax.broadcasted_iota(jnp.int32, x.shape, dimension=1)
    on_w = jnp.float32(1.0 - smoothing)
    off_w = jnp.float32(smoothing / (num_classes - 1.0))
    w = jnp.where(col == tgt, on_w, off_w)                # (TB, C)

    row_loss_ref[...] = -jnp.sum(w * log_prob, axis=-1, keepdims=True)


def _round_up(x, m):
    return (x + m - 1) // m * m


def _choose_tile_rows(batch, num_classes, itemsize=4, budget_bytes=8 * 1024 * 1024):
    # Bytes streamed per row per step (logits block dominates; x is
    # double-buffered by the pipeline, so budget is per-buffer).
    per_row = max(num_classes * itemsize * 2, 1)
    tb = budget_bytes // per_row
    tb = max(8, min(1024, (tb // 8) * 8))
    return min(tb, _round_up(batch, 8))


def smooth_cross_entropy_loss(logits, target, smoothing=0.1):
    """logits: (B, C) float, target: (B,) int. Returns scalar f32 loss."""
    B, C = logits.shape
    tb = _choose_tile_rows(B, C)

    # Pad batch to a tile multiple so every block is fully in-bounds; padded
    # rows are sliced away before the mean.
    Bp = _round_up(B, tb)
    if Bp != B:
        logits = jnp.pad(logits, ((0, Bp - B), (0, 0)))
        target = jnp.pad(target, (0, Bp - B))
    tgt2d = target.astype(jnp.int32).reshape(Bp, 1)

    kernel = functools.partial(
        _smooth_ce_kernel, smoothing=float(smoothing), num_classes=C
    )

    row_loss = pl.pallas_call(
        kernel,
        out_shape=jax.ShapeDtypeStruct((Bp, 1), jnp.float32),
        grid=(Bp // tb,),
        in_specs=[
            pl.BlockSpec((tb, C), lambda i: (i, 0)),   # logits tile
            pl.BlockSpec((tb, 1), lambda i: (i, 0)),   # targets tile
        ],
        out_specs=pl.BlockSpec((tb, 1), lambda i: (i, 0)),
        compiler_params=pltpu.CompilerParams(
            dimension_semantics=("parallel",),
            vmem_limit_bytes=48 * 1024 * 1024,
        ),
    )(logits, tgt2d)

    # Final mean over B scalars is trivially cheap; let XLA handle it.
    return jnp.mean(row_loss[:B, 0])


def _reference(logits, target, smoothing):
    log_prob = jax.nn.log_softmax(logits, axis=-1)
    C = logits.shape[-1]
    onehot = jax.nn.one_hot(target, C, dtype=logits.dtype)
    weight = jnp.full_like(logits, smoothing / (C - 1.0))
    weight = weight * (1.0 - onehot) + onehot * (1.0 - smoothing)
    return jnp.mean(jnp.sum(-weight * log_prob, axis=-1))


if __name__ == "__main__":
    # Module hyper-params (deterministic, synthetic).
    smoothing = 0.1
    batch = 8
    num_classes = 32

    key = jax.random.PRNGKey(0)
    kx, kt = jax.random.split(key)
    logits = jax.random.normal(kx, (batch, num_classes), dtype=jnp.float32)
    target = jax.random.randint(kt, (batch,), 0, num_classes, dtype=jnp.int32)

    loss = smooth_cross_entropy_loss(logits, target, smoothing)
    jax.block_until_ready(loss)

    ref = _reference(logits, target, smoothing)
    assert jnp.allclose(loss, ref, atol=1e-5, rtol=1e-5), (loss, ref)

    print("KERNEL_OK")
</pallas_src>

<mosaic_0001>
module attributes {stable_mosaic.version = 11 : i64} {
  func.func @_smooth_ce_kernel(%arg0: i32, %arg1: memref<8x32xf32, #tpu.memory_space<vmem>>, %arg2: memref<8x1xi32, #tpu.memory_space<vmem>>, %arg3: memref<8x1xf32, #tpu.memory_space<vmem>>) attributes {dimension_semantics = [#tpu.dimension_semantics<parallel>], iteration_bounds = array<i64: 1>, scalar_prefetch = 0 : i64, scratch_operands = 0 : i64, tpu.core_type = #tpu.core_type<tc>, window_params = [{transform_indices = @transform_0, window_bounds = array<i64: 8, 32>}, {transform_indices = @transform_1, window_bounds = array<i64: 8, 1>}, {transform_indices = @transform_2, window_bounds = array<i64: 8, 1>}]} {
    %c0 = arith.constant 0 : index
    %c0_0 = arith.constant 0 : index
    %0 = vector.load %arg1[%c0, %c0_0] : memref<8x32xf32, #tpu.memory_space<vmem>>, vector<8x32xf32>
    %c0_1 = arith.constant 0 : index
    %c0_2 = arith.constant 0 : index
    %1 = vector.load %arg2[%c0_1, %c0_2] : memref<8x1xi32, #tpu.memory_space<vmem>>, vector<8x1xi32>
    %cst = arith.constant dense<0xFF800000> : vector<8xf32>
    %2 = vector.multi_reduction <maximumf>, %0, %cst [1] : vector<8x32xf32> to vector<8xf32>
    %3 = vector.shape_cast %2 : vector<8xf32> to vector<8x1xf32>
    %4 = vector.broadcast %3 : vector<8x1xf32> to vector<8x32xf32>
    %5 = arith.subf %0, %4 : vector<8x32xf32>
    %6 = math.exp %5 : vector<8x32xf32>
    %cst_3 = arith.constant dense<0.000000e+00> : vector<8xf32>
    %7 = vector.multi_reduction <add>, %6, %cst_3 [1] : vector<8x32xf32> to vector<8xf32>
    %8 = vector.shape_cast %7 : vector<8xf32> to vector<8x1xf32>
    %9 = math.log %8 : vector<8x1xf32>
    %10 = vector.broadcast %9 : vector<8x1xf32> to vector<8x32xf32>
    %11 = arith.subf %5, %10 : vector<8x32xf32>
    %12 = tpu.iota {dimensions = array<i32: 1>} : vector<8x32xi32>
    %13 = vector.broadcast %1 : vector<8x1xi32> to vector<8x32xi32>
    %14 = arith.cmpi eq, %12, %13 : vector<8x32xi32>
    %cst_4 = arith.constant 0.899999976 : f32
    %cst_5 = arith.constant 0.0032258064 : f32
    %15 = vector.broadcast %cst_4 : f32 to vector<8x32xf32>
    %16 = vector.broadcast %cst_5 : f32 to vector<8x32xf32>
    %17 = arith.select %14, %15, %16 : vector<8x32xi1>, vector<8x32xf32>
    %18 = arith.mulf %17, %11 : vector<8x32xf32>
    %cst_6 = arith.constant dense<0.000000e+00> : vector<8xf32>
    %19 = vector.multi_reduction <add>, %18, %cst_6 [1] : vector<8x32xf32> to vector<8xf32>
    %20 = vector.shape_cast %19 : vector<8xf32> to vector<8x1xf32>
    %cst_7 = arith.constant 0.000000e+00 : f32
    %21 = vector.broadcast %cst_7 : f32 to vector<8x1xf32>
    %22 = arith.subf %21, %20 : vector<8x1xf32>
    %c0_8 = arith.constant 0 : index
    %c0_9 = arith.constant 0 : index
    %23 = vector.load %arg3[%c0_8, %c0_9] : memref<8x1xf32, #tpu.memory_space<vmem>>, vector<8x1xf32>
    tpu.vector_store %arg3[%c0_8, %c0_9], %22 {strides = array<i32>} : memref<8x1xf32, #tpu.memory_space<vmem>>, vector<8x1xf32>,
    return
  }
  func.func @transform_0(%arg0: i32) -> (i32, i32) {
    %c0_i32 = arith.constant 0 : i32
    %c0_i32_0 = arith.constant 0 : i32
    return %arg0, %c0_i32 : i32, i32
  }
  func.func @transform_1(%arg0: i32) -> (i32, i32) {
    %c0_i32 = arith.constant 0 : i32
    %c0_i32_0 = arith.constant 0 : i32
    return %arg0, %c0_i32 : i32, i32
  }
  func.func @transform_2(%arg0: i32) -> (i32, i32) {
    %c0_i32 = arith.constant 0 : i32
    %c0_i32_0 = arith.constant 0 : i32
    return %arg0, %c0_i32 : i32, i32
  }
}

</mosaic_0001>

<llo_original>
// kernel: tpu_custom_call.1
$region0: #{tpu_custom_call.1}
  #allocation0 [shape = 'u32[]', space=smem, size = 0x4, offset = 0x4, fixed_abs, tag = 'smem constant byte address 0x4 - core index']
  #allocation1 [shape = 'u32[72,128]{1,0:T(1,128)}', space=vmem, size = 0x9000, scoped, tag = 'internal scratch']
  %s0 = inlined_call_operand.vmem [shape: f32[8,32], index: 0, kind: input, shape index: {}]
  %s1 = inlined_call_operand.vmem [shape: s32[8,1], index: 1, kind: input, shape index: {}]
  %s2 = inlined_call_operand.vmem [shape: f32[8,1], index: 2, kind: output, shape index: {}]
  %s3 = sld [smem:[#allocation0]]
  $region18: #{tpu_custom_call.1} parent=0
    _
  %s5 = ssub.s32 1, %s3
  %s6 = scalar_select 0, %s5, %s3
  // Predicated region
  $region2: #{tpu_custom_call.1} parent=0 // pred_check
    _
  $region3: #{tpu_custom_call.1} parent=0 // pred_check_branch
    %8 = sbr.rel (0) target = $region5
  $region4: #{tpu_custom_call.1} parent=0 // pred_region
    _
  $region5: #{tpu_custom_call.1} parent=0 // pred_fallthru
    _
  // Predicated region
  $region6: #{tpu_custom_call.1} parent=0 // pred_check
    _
  $region7: #{tpu_custom_call.1} parent=0 // pred_check_branch
    %10 = sbr.rel (0) target = $region9
  $region8: #{tpu_custom_call.1} parent=0 // pred_region
    _
  $region9: #{tpu_custom_call.1} parent=0 // pred_fallthru
    _
  %v11 = vld [vmem:[%s0] sm:$0xff]
  %v12 = vld [vmem:[%s1] sm:$0xff]
  %vm13 = vcmask 261120
  %v14 = vsel %vm13, %v11, -inf
  %15 = vmax.xlane.f32.xlu0 %v14
  %v16 = vpop.xlane.xlu0 %15
  %v17 = vsub.f32 %v11, %v16
  %v18 = vmul.f32 %v17, 1.442695
  %v19 = vpow.pop %v18
  %v20 = vsel %vm13, %v19, 0.0
  %21 = vadd.xlane.f32.xlu0 %v20
  %v22 = vpop.xlane.xlu0 %21
  %v23 = vlog2.pop %v22
  %v24 = vmul.f32 %v23, 0.6931472
  %v25 = vsub.f32 %v17, %v24
  %v26 = vlaneseq
  %v27 = vand.u32 %v26, 127
  %28 = vset.pattern.permute.xlu0 0
  %29 = vperm.xlu0 %28, %v12
  %v30 = vpop.permute.xlu0 %29
  %vm31 = vcmp.eq.s32.totalorder %v27, %v30
  %v32 = vsel %vm31, 0.9, 0.0032258064
  %v33 = vmul.f32 %v32, %v25
  %v34 = vsel %vm13, %v33, 0.0
  %35 = vadd.xlane.f32.xlu0 %v34
  %v36 = vpop.xlane.xlu0 %35
  %v37 = vsub.f32 0.0, %v36
  %vm38 = vcmask 7168
  %39 = vst.msk [vmem:[%s2] sm:$0xff] %vm38, %v37
  // Predicated region
  $region10: #{tpu_custom_call.1} parent=0 // pred_check
    _
  $region11: #{tpu_custom_call.1} parent=0 // pred_check_branch
    %41 = sbr.rel (0) target = $region13
  $region12: #{tpu_custom_call.1} parent=0 // pred_region
    _
  $region13: #{tpu_custom_call.1} parent=0 // pred_fallthru
    _
  // Predicated region
  $region14: #{tpu_custom_call.1} parent=0 // pred_check
    _
  $region15: #{tpu_custom_call.1} parent=0 // pred_check_branch
    %43 = sbr.rel (0) target = $region17
  $region16: #{tpu_custom_call.1} parent=0 // pred_region
    _
  $region17: #{tpu_custom_call.1} parent=0 // pred_fallthru
    _

</llo_original>
